<compile_context>
chip_gen: v5e
topology: v5e:2x2
jax: 0.10.0
libtpu: 0.0.40
codegen_flags: <defaults>
</compile_context>

<pallas_src>
import jax
import jax.numpy as jnp
from jax.experimental import pallas as pl
from jax.experimental.pallas import tpu as pltpu

H = 768          # encoder hidden size (BERT-base style)
HID = 32         # classifier hidden width
NCLS = 2         # real number of output classes
NOUT = 128       # lane-dense padded output width (>= NCLS, multiple of 128)
MAX_TILE = 1024  # batch tile cap (fits comfortably in VMEM on v5e/v6e/v7x)


def _round_up(x, m):
    return ((x + m - 1) // m) * m


# ----------------------------- Pallas kernel ------------------------------
def classifier_kernel(emb1_ref, emb2_ref, w1_ref, b1_ref, w2_ref, b2_ref,
                      out_ref):
    # Static slices of the VMEM-resident (1536, 32) W1 are zero-cost views.
    w1a = w1_ref[:H, :]        # (768, 32) bf16
    w1b = w1_ref[H:, :]        # (768, 32) bf16
    # h = concat(emb1, emb2) @ W1 + b1  (bf16 inputs, f32 accumulation)
    h = (jnp.dot(emb1_ref[...], w1a, preferred_element_type=jnp.float32)
         + jnp.dot(emb2_ref[...], w1b, preferred_element_type=jnp.float32)
         + b1_ref[...])
    h = jnp.maximum(h, 0.0)    # ReLU
    # TODO(synk): nn.Dropout(p=0.5) is reproduced in eval mode (identity);
    # training-mode stochastic masking would need pltpu.prng_seed/random_bits.
    # Second linear against the lane-dense (32, 128) zero-padded W2.
    out_ref[...] = (jnp.dot(h, w2_ref[...], preferred_element_type=jnp.float32)
                    + b2_ref[...]).astype(out_ref.dtype)


def classifier_head(emb1, emb2, w1, b1, w2, b2, *, max_tile=MAX_TILE):
    """emb1, emb2: [B, 768].  w1: [1536, 32], b1: [32], w2: [32, 2], b2: [2]."""
    B = emb1.shape[0]

    # Batch tiling: tile must be a multiple of 8 (sublanes); pad B up to it.
    TB = min(max_tile, _round_up(B, 8))
    B_pad = _round_up(B, TB)
    if B_pad != B:
        pad = ((0, B_pad - B), (0, 0))
        emb1 = jnp.pad(emb1, pad)
        emb2 = jnp.pad(emb2, pad)

    # bf16 on the big matmul inputs (accumulation stays f32 in-kernel).
    emb1 = emb1.astype(jnp.bfloat16)
    emb2 = emb2.astype(jnp.bfloat16)
    w1_bf = w1.astype(jnp.bfloat16)                       # (1536, 32)
    b1r = b1.reshape(1, HID).astype(jnp.float32)          # (1, 32)
    # Lane-dense zero-padded second layer.
    w2p = jnp.zeros((HID, NOUT), jnp.float32).at[:, :NCLS].set(
        w2.astype(jnp.float32))
    b2p = jnp.zeros((1, NOUT), jnp.float32).at[:, :NCLS].set(
        b2.reshape(1, NCLS).astype(jnp.float32))

    grid = (B_pad // TB,)
    flops = B_pad * (2 * (2 * H) * HID + 2 * HID * NOUT)
    bytes_accessed = (2 * B_pad * H * 2          # emb1 + emb2 (bf16)
                      + (2 * H) * HID * 2        # w1 (bf16)
                      + HID * NOUT * 4 + NOUT * 4 + HID * 4
                      + B_pad * NOUT * 4)        # output
    cost = pl.CostEstimate(flops=flops, transcendentals=0,
                           bytes_accessed=bytes_accessed)

    out = pl.pallas_call(
        classifier_kernel,
        out_shape=jax.ShapeDtypeStruct((B_pad, NOUT), jnp.float32),
        grid=grid,
        in_specs=[
            pl.BlockSpec((TB, H), lambda i: (i, 0)),          # emb1 tile
            pl.BlockSpec((TB, H), lambda i: (i, 0)),          # emb2 tile
            pl.BlockSpec((2 * H, HID), lambda i: (0, 0)),     # w1 (resident)
            pl.BlockSpec((1, HID), lambda i: (0, 0)),         # b1 (resident)
            pl.BlockSpec((HID, NOUT), lambda i: (0, 0)),      # w2 (resident)
            pl.BlockSpec((1, NOUT), lambda i: (0, 0)),        # b2 (resident)
        ],
        out_specs=pl.BlockSpec((TB, NOUT), lambda i: (i, 0)),
        compiler_params=pltpu.CompilerParams(
            dimension_semantics=("parallel",)),
        cost_estimate=cost,
    )(emb1, emb2, w1_bf, b1r, w2p, b2p)

    return out[:B, :NCLS]


# ----------------------- synthetic encoder (plain JAX glue) ----------------
# The PyTorch module takes an *injected* encoder (e.g. a HuggingFace model);
# stand in a small deterministic encoder producing last_hidden_state [B,S,768].
def synthetic_encoder(ids, mask, embed_table, enc_w):
    h = embed_table[ids]                       # [B, S, H]
    h = h * mask[..., None].astype(h.dtype)    # apply attention mask
    last_hidden_state = jnp.tanh(jnp.einsum('bsh,hk->bsk', h, enc_w))
    return last_hidden_state                   # [B, S, H]


def similarity_classifier_forward(params, input1_ids, input1_mask,
                                  input2_ids, input2_mask):
    emb1 = synthetic_encoder(input1_ids, input1_mask,
                             params['embed'], params['enc_w'])[:, 0, :]
    emb2 = synthetic_encoder(input2_ids, input2_mask,
                             params['embed'], params['enc_w'])[:, 0, :]
    return classifier_head(emb1, emb2,
                           params['w1'], params['b1'],
                           params['w2'], params['b2'])


# ------------------------------ param init --------------------------------
def init_params(key, vocab=50):
    k = jax.random.split(key, 6)
    # Encoder stand-in params.
    embed = jax.random.normal(k[0], (vocab, H), jnp.float32) * 0.02
    enc_w = jax.random.normal(k[1], (H, H), jnp.float32) * 0.02
    # Classifier: _init_weights -> normal_ on Linear weights; biases default.
    w1_t = jax.random.normal(k[2], (HID, 2 * H), jnp.float32)   # torch (out,in)
    w2_t = jax.random.normal(k[3], (NCLS, HID), jnp.float32)
    b1 = jax.random.uniform(k[4], (HID,), jnp.float32,
                            minval=-1.0 / jnp.sqrt(2.0 * H),
                            maxval=1.0 / jnp.sqrt(2.0 * H))
    b2 = jax.random.uniform(k[5], (NCLS,), jnp.float32,
                            minval=-1.0 / jnp.sqrt(float(HID)),
                            maxval=1.0 / jnp.sqrt(float(HID)))
    return {
        'embed': embed, 'enc_w': enc_w,
        'w1': w1_t.T,   # (1536, 32) so kernel does x @ W
        'b1': b1,
        'w2': w2_t.T,   # (32, 2)
        'b2': b2,
    }


# --------------------------------- main ------------------------------------
if __name__ == "__main__":
    key = jax.random.PRNGKey(0)
    kp, k1, k2 = jax.random.split(key, 3)

    B, S, VOCAB = 2, 8, 50
    params = init_params(kp, vocab=VOCAB)

    input1_ids = jax.random.randint(k1, (B, S), 0, VOCAB, dtype=jnp.int32)
    input2_ids = jax.random.randint(k2, (B, S), 0, VOCAB, dtype=jnp.int32)
    input1_mask = jnp.ones((B, S), jnp.int32)
    input2_mask = jnp.ones((B, S), jnp.int32)

    out = similarity_classifier_forward(params, input1_ids, input1_mask,
                                        input2_ids, input2_mask)
    out = jax.block_until_ready(out)

    # Pure-JAX reference for the classifier head (eval-mode dropout), using
    # the same bf16-input / f32-accumulation arithmetic as the kernel.
    emb1 = synthetic_encoder(input1_ids, input1_mask,
                             params['embed'], params['enc_w'])[:, 0, :]
    emb2 = synthetic_encoder(input2_ids, input2_mask,
                             params['embed'], params['enc_w'])[:, 0, :]
    agg = jnp.concatenate([emb1.astype(jnp.bfloat16),
                           emb2.astype(jnp.bfloat16)], axis=1)
    h_ref = jnp.maximum(
        jnp.dot(agg, params['w1'].astype(jnp.bfloat16),
                preferred_element_type=jnp.float32) + params['b1'], 0.0)
    ref = jnp.dot(h_ref, params['w2'],
                  preferred_element_type=jnp.float32) + params['b2']

    assert out.shape == (B, NCLS), out.shape
    assert jnp.allclose(out, ref, atol=1e-2, rtol=1e-2), (out, ref)
    print("KERNEL_OK")
</pallas_src>

<mosaic_0001>
module attributes {stable_mosaic.version = 11 : i64} {
  func.func @classifier_kernel(%arg0: i32, %arg1: memref<8x768xbf16, #tpu.memory_space<vmem>>, %arg2: memref<8x768xbf16, #tpu.memory_space<vmem>>, %arg3: memref<1536x32xbf16, #tpu.memory_space<vmem>>, %arg4: memref<1x32xf32, #tpu.memory_space<vmem>>, %arg5: memref<32x128xf32, #tpu.memory_space<vmem>>, %arg6: memref<1x128xf32, #tpu.memory_space<vmem>>, %arg7: memref<8x128xf32, #tpu.memory_space<vmem>>) attributes {dimension_semantics = [#tpu.dimension_semantics<parallel>], iteration_bounds = array<i64: 1>, scalar_prefetch = 0 : i64, scratch_operands = 0 : i64, tpu.core_type = #tpu.core_type<tc>, window_params = [{transform_indices = @transform_0, window_bounds = array<i64: 8, 768>}, {transform_indices = @transform_1, window_bounds = array<i64: 8, 768>}, {pipeline_mode = #tpu.pipeline_mode<synchronous>, transform_indices = @transform_2, window_bounds = array<i64: 1536, 32>}, {pipeline_mode = #tpu.pipeline_mode<synchronous>, transform_indices = @transform_3, window_bounds = array<i64: 1, 32>}, {pipeline_mode = #tpu.pipeline_mode<synchronous>, transform_indices = @transform_4, window_bounds = array<i64: 32, 128>}, {pipeline_mode = #tpu.pipeline_mode<synchronous>, transform_indices = @transform_5, window_bounds = array<i64: 1, 128>}, {transform_indices = @transform_6, window_bounds = array<i64: 8, 128>}]} {
    %c0 = arith.constant 0 : index
    %c0_0 = arith.constant 0 : index
    %0 = vector.load %arg3[%c0, %c0_0] : memref<1536x32xbf16, #tpu.memory_space<vmem>>, vector<768x32xbf16>
    %c768 = arith.constant 768 : index
    %c0_1 = arith.constant 0 : index
    %1 = vector.load %arg3[%c768, %c0_1] : memref<1536x32xbf16, #tpu.memory_space<vmem>>, vector<768x32xbf16>
    %c0_2 = arith.constant 0 : index
    %c0_3 = arith.constant 0 : index
    %2 = vector.load %arg1[%c0_2, %c0_3] : memref<8x768xbf16, #tpu.memory_space<vmem>>, vector<8x768xbf16>
    %cst = arith.constant dense<0.000000e+00> : vector<8x32xf32>
    %3 = tpu.matmul %2, %0, %cst {dimension_numbers = #tpu.dot_dimension_numbers<[1], [0], [0], [1], [0, 0, 1, 1], [], []>} : vector<8x768xbf16>, vector<768x32xbf16>, vector<8x32xf32> -> vector<8x32xf32>
    %c0_4 = arith.constant 0 : index
    %c0_5 = arith.constant 0 : index
    %4 = vector.load %arg2[%c0_4, %c0_5] : memref<8x768xbf16, #tpu.memory_space<vmem>>, vector<8x768xbf16>
    %cst_6 = arith.constant dense<0.000000e+00> : vector<8x32xf32>
    %5 = tpu.matmul %4, %1, %cst_6 {dimension_numbers = #tpu.dot_dimension_numbers<[1], [0], [0], [1], [0, 0, 1, 1], [], []>} : vector<8x768xbf16>, vector<768x32xbf16>, vector<8x32xf32> -> vector<8x32xf32>
    %6 = arith.addf %3, %5 : vector<8x32xf32>
    %c0_7 = arith.constant 0 : index
    %c0_8 = arith.constant 0 : index
    %7 = vector.load %arg4[%c0_7, %c0_8] : memref<1x32xf32, #tpu.memory_space<vmem>>, vector<1x32xf32>
    %8 = vector.broadcast %7 : vector<1x32xf32> to vector<8x32xf32>
    %9 = arith.addf %6, %8 : vector<8x32xf32>
    %cst_9 = arith.constant 0.000000e+00 : f32
    %10 = vector.broadcast %cst_9 : f32 to vector<8x32xf32>
    %11 = arith.maximumf %9, %10 : vector<8x32xf32>
    %c0_10 = arith.constant 0 : index
    %c0_11 = arith.constant 0 : index
    %12 = vector.load %arg5[%c0_10, %c0_11] : memref<32x128xf32, #tpu.memory_space<vmem>>, vector<32x128xf32>
    %cst_12 = arith.constant dense<0.000000e+00> : vector<8x128xf32>
    %13 = tpu.matmul %11, %12, %cst_12 {dimension_numbers = #tpu.dot_dimension_numbers<[1], [0], [0], [1], [0, 0, 1, 1], [], []>} : vector<8x32xf32>, vector<32x128xf32>, vector<8x128xf32> -> vector<8x128xf32>
    %c0_13 = arith.constant 0 : index
    %c0_14 = arith.constant 0 : index
    %14 = vector.load %arg6[%c0_13, %c0_14] : memref<1x128xf32, #tpu.memory_space<vmem>>, vector<1x128xf32>
    %15 = vector.broadcast %14 : vector<1x128xf32> to vector<8x128xf32>
    %16 = arith.addf %13, %15 : vector<8x128xf32>
    %c0_15 = arith.constant 0 : index
    %c0_16 = arith.constant 0 : index
    %17 = vector.load %arg7[%c0_15, %c0_16] : memref<8x128xf32, #tpu.memory_space<vmem>>, vector<8x128xf32>
    tpu.vector_store %arg7[%c0_15, %c0_16], %16 {strides = array<i32>} : memref<8x128xf32, #tpu.memory_space<vmem>>, vector<8x128xf32>,
    return
  }
  func.func @transform_0(%arg0: i32) -> (i32, i32) {
    %c0_i32 = arith.constant 0 : i32
    %c0_i32_0 = arith.constant 0 : i32
    return %arg0, %c0_i32 : i32, i32
  }
  func.func @transform_1(%arg0: i32) -> (i32, i32) {
    %c0_i32 = arith.constant 0 : i32
    %c0_i32_0 = arith.constant 0 : i32
    return %arg0, %c0_i32 : i32, i32
  }
  func.func @transform_2(%arg0: i32) -> (i32, i32) {
    %c0_i32 = arith.constant 0 : i32
    %c0_i32_0 = arith.constant 0 : i32
    %c0_i32_1 = arith.constant 0 : i32
    return %c0_i32, %c0_i32_0 : i32, i32
  }
  func.func @transform_3(%arg0: i32) -> (i32, i32) {
    %c0_i32 = arith.constant 0 : i32
    %c0_i32_0 = arith.constant 0 : i32
    %c0_i32_1 = arith.constant 0 : i32
    return %c0_i32, %c0_i32_0 : i32, i32
  }
  func.func @transform_4(%arg0: i32) -> (i32, i32) {
    %c0_i32 = arith.constant 0 : i32
    %c0_i32_0 = arith.constant 0 : i32
    %c0_i32_1 = arith.constant 0 : i32
    return %c0_i32, %c0_i32_0 : i32, i32
  }
  func.func @transform_5(%arg0: i32) -> (i32, i32) {
    %c0_i32 = arith.constant 0 : i32
    %c0_i32_0 = arith.constant 0 : i32
    %c0_i32_1 = arith.constant 0 : i32
    return %c0_i32, %c0_i32_0 : i32, i32
  }
  func.func @transform_6(%arg0: i32) -> (i32, i32) {
    %c0_i32 = arith.constant 0 : i32
    %c0_i32_0 = arith.constant 0 : i32
    return %arg0, %c0_i32 : i32, i32
  }
}

</mosaic_0001>

<llo_original>
// kernel: tpu_custom_call.1
$region0: #{tpu_custom_call.1}
  #allocation0 [shape = 'u32[]', space=smem, size = 0x4, offset = 0x4, fixed_abs, tag = 'smem constant byte address 0x4 - core index']
  #allocation1 [shape = 'u32[72,128]{1,0:T(1,128)}', space=vmem, size = 0x9000, scoped, tag = 'internal scratch']
  %s0 = inlined_call_operand.vmem [shape: bf16[8,768], index: 0, kind: input, shape index: {}]
  %s1 = inlined_call_operand.vmem [shape: bf16[8,768], index: 1, kind: input, shape index: {}]
  %s2 = inlined_call_operand.vmem [shape: bf16[1536,32], index: 2, kind: input, shape index: {}]
  %s3 = inlined_call_operand.vmem [shape: f32[1,32], index: 3, kind: input, shape index: {}]
  %s4 = inlined_call_operand.vmem [shape: f32[32,128], index: 4, kind: input, shape index: {}]
  %s5 = inlined_call_operand.vmem [shape: f32[1,128], index: 5, kind: input, shape index: {}]
  %s6 = inlined_call_operand.hbm [shape: f32[8,128], index: 6, kind: output, shape index: {}]
  %s7 = sld [smem:[#allocation0]]
  $region34: #{tpu_custom_call.1} parent=0
    _
  %s9 = ssub.s32 1, %s7
  %s10 = scalar_select 0, %s9, %s7
  $region1: #{tpu_custom_call.1} parent=0
    #allocation2 [shape = 'u8[4096]{0}', space=vmem, size = 0x1000, scoped, tag = 'output window, operand 0, single buffered']
    #allocation3 [shape = 's32[1]{0}', space=sflag, size = 0x4, scoped, tag = 'scoped memory for tpu_custom_call.1']
    %11 = vsyncpa [#allocation3], 0
    // Predicated region
    $region2: #{tpu_custom_call.1} parent=1 // pred_check
      _
    $region3: #{tpu_custom_call.1} parent=1 // pred_check_branch
      %13 = sbr.rel (0) target = $region5
    $region4: #{tpu_custom_call.1} parent=1 // pred_region
      _
    $region5: #{tpu_custom_call.1} parent=1 // pred_fallthru
      _
    // Predicated region
    $region6: #{tpu_custom_call.1} parent=1 // pred_check
      _
    $region7: #{tpu_custom_call.1} parent=1 // pred_check_branch
      %15 = sbr.rel (0) target = $region9
    $region8: #{tpu_custom_call.1} parent=1 // pred_region
      _
    $region9: #{tpu_custom_call.1} parent=1 // pred_fallthru
      _
    // Predicated region
    $region10: #{tpu_custom_call.1} parent=1 // pred_check
      _
    $region11: #{tpu_custom_call.1} parent=1 // pred_check_branch
      %17 = sbr.rel (0) target = $region13
    $region12: #{tpu_custom_call.1} parent=1 // pred_region
      _
    $region13: #{tpu_custom_call.1} parent=1 // pred_fallthru
      _
    // Predicated region
    $region14: #{tpu_custom_call.1} parent=1 // pred_check
      _
    $region15: #{tpu_custom_call.1} parent=1 // pred_check_branch
      %19 = sbr.rel (0) target = $region17
    $region16: #{tpu_custom_call.1} parent=1 // pred_region
      _
    $region17: #{tpu_custom_call.1} parent=1 // pred_fallthru
      _
    // Predicated region
    $region18: #{tpu_custom_call.1} parent=1 // pred_check
      _
    $region19: #{tpu_custom_call.1} parent=1 // pred_check_branch
      %21 = sbr.rel (0) target = $region21
    $region20: #{tpu_custom_call.1} parent=1 // pred_region
      _
    $region21: #{tpu_custom_call.1} parent=1 // pred_fallthru
      _
    // Predicated region
    $region22: #{tpu_custom_call.1} parent=1 // pred_check
      _
    $region23: #{tpu_custom_call.1} parent=1 // pred_check_branch
      %23 = sbr.rel (0) target = $region25
    $region24: #{tpu_custom_call.1} parent=1 // pred_region
      _
    $region25: #{tpu_custom_call.1} parent=1 // pred_fallthru
      _
    %v24 = vld [vmem:[%s2] sm:$0xf]
    %v25 = vld [vmem:[%s2 + $0x4] sm:$0xf]
    %v26 = vld [vmem:[%s2 + $0x8] sm:$0xf]
    %v27 = vld [vmem:[%s2 + $0xc] sm:$0xf]
    %v28 = vld [vmem:[%s2 + $0x10] sm:$0xf]
    %v29 = vld [vmem:[%s2 + $0x14] sm:$0xf]
    %v30 = vld [vmem:[%s2 + $0x18] sm:$0xf]
    %v31 = vld [vmem:[%s2 + $0x1c] sm:$0xf]
    %v32 = vld [vmem:[%s2 + $0x20] sm:$0xf]
    %v33 = vld [vmem:[%s2 + $0x24] sm:$0xf]
    %v34 = vld [vmem:[%s2 + $0x28] sm:$0xf]
    %v35 = vld [vmem:[%s2 + $0x2c] sm:$0xf]
    %v36 = vld [vmem:[%s2 + $0x30] sm:$0xf]
    %v37 = vld [vmem:[%s2 + $0x34] sm:$0xf]
    %v38 = vld [vmem:[%s2 + $0x38] sm:$0xf]
    %v39 = vld [vmem:[%s2 + $0x3c] sm:$0xf]
    %v40 = vld [vmem:[%s2 + $0x40] sm:$0xf]
    %v41 = vld [vmem:[%s2 + $0x44] sm:$0xf]
    %v42 = vld [vmem:[%s2 + $0x48] sm:$0xf]
    %v43 = vld [vmem:[%s2 + $0x4c] sm:$0xf]
    %v44 = vld [vmem:[%s2 + $0x50] sm:$0xf]
    %v45 = vld [vmem:[%s2 + $0x54] sm:$0xf]
    %v46 = vld [vmem:[%s2 + $0x58] sm:$0xf]
    %v47 = vld [vmem:[%s2 + $0x5c] sm:$0xf]
    %v48 = vld [vmem:[%s2 + $0x60] sm:$0xf]
    %v49 = vld [vmem:[%s2 + $0x64] sm:$0xf]
    %v50 = vld [vmem:[%s2 + $0x68] sm:$0xf]
    %v51 = vld [vmem:[%s2 + $0x6c] sm:$0xf]
    %v52 = vld [vmem:[%s2 + $0x70] sm:$0xf]
    %v53 = vld [vmem:[%s2 + $0x74] sm:$0xf]
    %v54 = vld [vmem:[%s2 + $0x78] sm:$0xf]
    %v55 = vld [vmem:[%s2 + $0x7c] sm:$0xf]
    %v56 = vld [vmem:[%s2 + $0x80] sm:$0xf]
    %v57 = vld [vmem:[%s2 + $0x84] sm:$0xf]
    %v58 = vld [vmem:[%s2 + $0x88] sm:$0xf]
    %v59 = vld [vmem:[%s2 + $0x8c] sm:$0xf]
    %v60 = vld [vmem:[%s2 + $0x90] sm:$0xf]
    %v61 = vld [vmem:[%s2 + $0x94] sm:$0xf]
    %v62 = vld [vmem:[%s2 + $0x98] sm:$0xf]
    %v63 = vld [vmem:[%s2 + $0x9c] sm:$0xf]
    %v64 = vld [vmem:[%s2 + $0xa0] sm:$0xf]
    %v65 = vld [vmem:[%s2 + $0xa4] sm:$0xf]
    %v66 = vld [vmem:[%s2 + $0xa8] sm:$0xf]
    %v67 = vld [vmem:[%s2 + $0xac] sm:$0xf]
    %v68 = vld [vmem:[%s2 + $0xb0] sm:$0xf]
    %v69 = vld [vmem:[%s2 + $0xb4] sm:$0xf]
    %v70 = vld [vmem:[%s2 + $0xb8] sm:$0xf]
    %v71 = vld [vmem:[%s2 + $0xbc] sm:$0xf]
    %v72 = vld [vmem:[%s2 + $0xc0] sm:$0xf]
    %v73 = vld [vmem:[%s2 + $0xc4] sm:$0xf]
    %v74 = vld [vmem:[%s2 + $0xc8] sm:$0xf]
    %v75 = vld [vmem:[%s2 + $0xcc] sm:$0xf]
    %v76 = vld [vmem:[%s2 + $0xd0] sm:$0xf]
    %v77 = vld [vmem:[%s2 + $0xd4] sm:$0xf]
    %v78 = vld [vmem:[%s2 + $0xd8] sm:$0xf]
    %v79 = vld [vmem:[%s2 + $0xdc] sm:$0xf]
    %v80 = vld [vmem:[%s2 + $0xe0] sm:$0xf]
    %v81 = vld [vmem:[%s2 + $0xe4] sm:$0xf]
    %v82 = vld [vmem:[%s2 + $0xe8] sm:$0xf]
    %v83 = vld [vmem:[%s2 + $0xec] sm:$0xf]
    %v84 = vld [vmem:[%s2 + $0xf0] sm:$0xf]
    %v85 = vld [vmem:[%s2 + $0xf4] sm:$0xf]
    %v86 = vld [vmem:[%s2 + $0xf8] sm:$0xf]
    %v87 = vld [vmem:[%s2 + $0xfc] sm:$0xf]
    %v88 = vld [vmem:[%s2 + $0x100] sm:$0xf]
    %v89 = vld [vmem:[%s2 + $0x104] sm:$0xf]
    %v90 = vld [vmem:[%s2 + $0x108] sm:$0xf]
    %v91 = vld [vmem:[%s2 + $0x10c] sm:$0xf]
    %v92 = vld [vmem:[%s2 + $0x110] sm:$0xf]
    %v93 = vld [vmem:[%s2 + $0x114] sm:$0xf]
    %v94 = vld [vmem:[%s2 + $0x118] sm:$0xf]
    %v95 = vld [vmem:[%s2 + $0x11c] sm:$0xf]
    %v96 = vld [vmem:[%s2 + $0x120] sm:$0xf]
    %v97 = vld [vmem:[%s2 + $0x124] sm:$0xf]
    %v98 = vld [vmem:[%s2 + $0x128] sm:$0xf]
    %v99 = vld [vmem:[%s2 + $0x12c] sm:$0xf]
    %v100 = vld [vmem:[%s2 + $0x130] sm:$0xf]
    %v101 = vld [vmem:[%s2 + $0x134] sm:$0xf]
    %v102 = vld [vmem:[%s2 + $0x138] sm:$0xf]
    %v103 = vld [vmem:[%s2 + $0x13c] sm:$0xf]
    %v104 = vld [vmem:[%s2 + $0x140] sm:$0xf]
    %v105 = vld [vmem:[%s2 + $0x144] sm:$0xf]
    %v106 = vld [vmem:[%s2 + $0x148] sm:$0xf]
    %v107 = vld [vmem:[%s2 + $0x14c] sm:$0xf]
    %v108 = vld [vmem:[%s2 + $0x150] sm:$0xf]
    %v109 = vld [vmem:[%s2 + $0x154] sm:$0xf]
    %v110 = vld [vmem:[%s2 + $0x158] sm:$0xf]
    %v111 = vld [vmem:[%s2 + $0x15c] sm:$0xf]
    %v112 = vld [vmem:[%s2 + $0x160] sm:$0xf]
    %v113 = vld [vmem:[%s2 + $0x164] sm:$0xf]
    %v114 = vld [vmem:[%s2 + $0x168] sm:$0xf]
    %v115 = vld [vmem:[%s2 + $0x16c] sm:$0xf]
    %v116 = vld [vmem:[%s2 + $0x170] sm:$0xf]
    %v117 = vld [vmem:[%s2 + $0x174] sm:$0xf]
    %v118 = vld [vmem:[%s2 + $0x178] sm:$0xf]
    %v119 = vld [vmem:[%s2 + $0x17c] sm:$0xf]
    %v120 = vld [vmem:[%s2 + $0x180] sm:$0xf]
    %v121 = vld [vmem:[%s2 + $0x184] sm:$0xf]
    %v122 = vld [vmem:[%s2 + $0x188] sm:$0xf]
    %v123 = vld [vmem:[%s2 + $0x18c] sm:$0xf]
    %v124 = vld [vmem:[%s2 + $0x190] sm:$0xf]
    %v125 = vld [vmem:[%s2 + $0x194] sm:$0xf]
    %v126 = vld [vmem:[%s2 + $0x198] sm:$0xf]
    %v127 = vld [vmem:[%s2 + $0x19c] sm:$0xf]
    %v128 = vld [vmem:[%s2 + $0x1a0] sm:$0xf]
    %v129 = vld [vmem:[%s2 + $0x1a4] sm:$0xf]
    %v130 = vld [vmem:[%s2 + $0x1a8] sm:$0xf]
    %v131 = vld [vmem:[%s2 + $0x1ac] sm:$0xf]
    %v132 = vld [vmem:[%s2 + $0x1b0] sm:$0xf]
    %v133 = vld [vmem:[%s2 + $0x1b4] sm:$0xf]
    %v134 = vld [vmem:[%s2 + $0x1b8] sm:$0xf]
    %v135 = vld [vmem:[%s2 + $0x1bc] sm:$0xf]
    %v136 = vld [vmem:[%s2 + $0x1c0] sm:$0xf]
    %v137 = vld [vmem:[%s2 + $0x1c4] sm:$0xf]
    %v138 = vld [vmem:[%s2 + $0x1c8] sm:$0xf]
    %v139 = vld [vmem:[%s2 + $0x1cc] sm:$0xf]
    %v140 = vld [vmem:[%s2 + $0x1d0] sm:$0xf]
    %v141 = vld [vmem:[%s2 + $0x1d4] sm:$0xf]
    %v142 = vld [vmem:[%s2 + $0x1d8] sm:$0xf]
    %v143 = vld [vmem:[%s2 + $0x1dc] sm:$0xf]
    %v144 = vld [vmem:[%s2 + $0x1e0] sm:$0xf]
    %v145 = vld [vmem:[%s2 + $0x1e4] sm:$0xf]
    %v146 = vld [vmem:[%s2 + $0x1e8] sm:$0xf]
    %v147 = vld [vmem:[%s2 + $0x1ec] sm:$0xf]
    %v148 = vld [vmem:[%s2 + $0x1f0] sm:$0xf]
    %v149 = vld [vmem:[%s2 + $0x1f4] sm:$0xf]
    %v150 = vld [vmem:[%s2 + $0x1f8] sm:$0xf]
    %v151 = vld [vmem:[%s2 + $0x1fc] sm:$0xf]
    %v152 = vld [vmem:[%s2 + $0x200] sm:$0xf]
    %v153 = vld [vmem:[%s2 + $0x204] sm:$0xf]
    %v154 = vld [vmem:[%s2 + $0x208] sm:$0xf]
    %v155 = vld [vmem:[%s2 + $0x20c] sm:$0xf]
    %v156 = vld [vmem:[%s2 + $0x210] sm:$0xf]
    %v157 = vld [vmem:[%s2 + $0x214] sm:$0xf]
    %v158 = vld [vmem:[%s2 + $0x218] sm:$0xf]
    %v159 = vld [vmem:[%s2 + $0x21c] sm:$0xf]
    %v160 = vld [vmem:[%s2 + $0x220] sm:$0xf]
    %v161 = vld [vmem:[%s2 + $0x224] sm:$0xf]
    %v162 = vld [vmem:[%s2 + $0x228] sm:$0xf]
    %v163 = vld [vmem:[%s2 + $0x22c] sm:$0xf]
    %v164 = vld [vmem:[%s2 + $0x230] sm:$0xf]
    %v165 = vld [vmem:[%s2 + $0x234] sm:$0xf]
    %v166 = vld [vmem:[%s2 + $0x238] sm:$0xf]
    %v167 = vld [vmem:[%s2 + $0x23c] sm:$0xf]
    %v168 = vld [vmem:[%s2 + $0x240] sm:$0xf]
    %v169 = vld [vmem:[%s2 + $0x244] sm:$0xf]
    %v170 = vld [vmem:[%s2 + $0x248] sm:$0xf]
    %v171 = vld [vmem:[%s2 + $0x24c] sm:$0xf]
    %v172 = vld [vmem:[%s2 + $0x250] sm:$0xf]
    %v173 = vld [vmem:[%s2 + $0x254] sm:$0xf]
    %v174 = vld [vmem:[%s2 + $0x258] sm:$0xf]
    %v175 = vld [vmem:[%s2 + $0x25c] sm:$0xf]
    %v176 = vld [vmem:[%s2 + $0x260] sm:$0xf]
    %v177 = vld [vmem:[%s2 + $0x264] sm:$0xf]
    %v178 = vld [vmem:[%s2 + $0x268] sm:$0xf]
    %v179 = vld [vmem:[%s2 + $0x26c] sm:$0xf]
    %v180 = vld [vmem:[%s2 + $0x270] sm:$0xf]
    %v181 = vld [vmem:[%s2 + $0x274] sm:$0xf]
    %v182 = vld [vmem:[%s2 + $0x278] sm:$0xf]
    %v183 = vld [vmem:[%s2 + $0x27c] sm:$0xf]
    %v184 = vld [vmem:[%s2 + $0x280] sm:$0xf]
    %v185 = vld [vmem:[%s2 + $0x284] sm:$0xf]
    %v186 = vld [vmem:[%s2 + $0x288] sm:$0xf]
    %v187 = vld [vmem:[%s2 + $0x28c] sm:$0xf]
    %v188 = vld [vmem:[%s2 + $0x290] sm:$0xf]
    %v189 = vld [vmem:[%s2 + $0x294] sm:$0xf]
    %v190 = vld [vmem:[%s2 + $0x298] sm:$0xf]
    %v191 = vld [vmem:[%s2 + $0x29c] sm:$0xf]
    %v192 = vld [vmem:[%s2 + $0x2a0] sm:$0xf]
    %v193 = vld [vmem:[%s2 + $0x2a4] sm:$0xf]
    %v194 = vld [vmem:[%s2 + $0x2a8] sm:$0xf]
    %v195 = vld [vmem:[%s2 + $0x2ac] sm:$0xf]
    %v196 = vld [vmem:[%s2 + $0x2b0] sm:$0xf]
    %v197 = vld [vmem:[%s2 + $0x2b4] sm:$0xf]
    %v198 = vld [vmem:[%s2 + $0x2b8] sm:$0xf]
    %v199 = vld [vmem:[%s2 + $0x2bc] sm:$0xf]
    %v200 = vld [vmem:[%s2 + $0x2c0] sm:$0xf]
    %v201 = vld [vmem:[%s2 + $0x2c4] sm:$0xf]
    %v202 = vld [vmem:[%s2 + $0x2c8] sm:$0xf]
    %v203 = vld [vmem:[%s2 + $0x2cc] sm:$0xf]
    %v204 = vld [vmem:[%s2 + $0x2d0] sm:$0xf]
    %v205 = vld [vmem:[%s2 + $0x2d4] sm:$0xf]
    %v206 = vld [vmem:[%s2 + $0x2d8] sm:$0xf]
    %v207 = vld [vmem:[%s2 + $0x2dc] sm:$0xf]
    %v208 = vld [vmem:[%s2 + $0x2e0] sm:$0xf]
    %v209 = vld [vmem:[%s2 + $0x2e4] sm:$0xf]
    %v210 = vld [vmem:[%s2 + $0x2e8] sm:$0xf]
    %v211 = vld [vmem:[%s2 + $0x2ec] sm:$0xf]
    %v212 = vld [vmem:[%s2 + $0x2f0] sm:$0xf]
    %v213 = vld [vmem:[%s2 + $0x2f4] sm:$0xf]
    %v214 = vld [vmem:[%s2 + $0x2f8] sm:$0xf]
    %v215 = vld [vmem:[%s2 + $0x2fc] sm:$0xf]
    %v216 = vld [vmem:[%s0] sm:$0xff]
    %v217 = vld [vmem:[%s0 + $0x8] sm:$0xff]
    %v218 = vld [vmem:[%s0 + $0x10] sm:$0xff]
    %v219 = vld [vmem:[%s1] sm:$0xff]
    %v220 = vld [vmem:[%s1 + $0x8] sm:$0xff]
    %v221 = vld [vmem:[%s1 + $0x10] sm:$0xff]
    %v225 = vunpack.c.l.b16 %v219
    %v226 = vunpack.c.h.b16 %v219
    %v227 = vunpack.c.l.b16 %v220
    %v228 = vunpack.c.h.b16 %v220
    %v229 = vunpack.c.l.b16 %v221
    %v230 = vunpack.c.h.b16 %v221
    %v231 = vpack.c.b16 %v225, %v225
    %v232 = vpack.c.b16 %v226, %v226
    %v233 = vpack.c.b16 %v227, %v227
    %v234 = vpack.c.b16 %v228, %v228
    %v235 = vpack.c.b16 %v229, %v229
    %v236 = vpack.c.b16 %v230, %v230
    %v339 = vunpack.c.l.b16 %v120
    %v340 = vunpack.c.l.b16 %v121
    %v341 = vunpack.c.l.b16 %v122
    %v342 = vunpack.c.l.b16 %v123
    %v343 = vunpack.c.l.b16 %v124
    %v344 = vunpack.c.l.b16 %v125
    %v345 = vunpack.c.l.b16 %v126
    %v346 = vunpack.c.l.b16 %v127
    %v347 = vunpack.c.l.b16 %v128
    %v348 = vunpack.c.l.b16 %v129
    %v349 = vunpack.c.l.b16 %v130
    %v350 = vunpack.c.l.b16 %v131
    %v351 = vunpack.c.l.b16 %v132
    %v352 = vunpack.c.l.b16 %v133
    %v353 = vunpack.c.l.b16 %v134
    %v354 = vunpack.c.l.b16 %v135
    %v355 = vunpack.c.l.b16 %v136
    %v356 = vunpack.c.l.b16 %v137
    %v357 = vunpack.c.l.b16 %v138
    %v358 = vunpack.c.l.b16 %v139
    %v359 = vunpack.c.l.b16 %v140
    %v360 = vunpack.c.l.b16 %v141
    %v361 = vunpack.c.l.b16 %v142
    %v362 = vunpack.c.l.b16 %v143
    %v363 = vunpack.c.l.b16 %v144
    %v364 = vunpack.c.l.b16 %v145
    %v365 = vunpack.c.l.b16 %v146
    %v366 = vunpack.c.l.b16 %v147
    %v367 = vunpack.c.l.b16 %v148
    %v368 = vunpack.c.l.b16 %v149
    %v369 = vunpack.c.l.b16 %v150
    %v370 = vunpack.c.l.b16 %v151
    %v371 = vunpack.c.l.b16 %v152
    %v372 = vunpack.c.l.b16 %v153
    %v373 = vunpack.c.l.b16 %v154
    %v374 = vunpack.c.l.b16 %v155
    %v375 = vunpack.c.l.b16 %v156
    %v376 = vunpack.c.l.b16 %v157
    %v377 = vunpack.c.l.b16 %v158
    %v378 = vunpack.c.l.b16 %v159
    %v379 = vunpack.c.l.b16 %v160
    %v380 = vunpack.c.l.b16 %v161
    %v381 = vunpack.c.l.b16 %v162
    %v382 = vunpack.c.l.b16 %v163
    %v383 = vunpack.c.l.b16 %v164
    %v384 = vunpack.c.l.b16 %v165
    %v385 = vunpack.c.l.b16 %v166
    %v386 = vunpack.c.l.b16 %v167
    %v387 = vunpack.c.l.b16 %v168
    %v388 = vunpack.c.l.b16 %v169
    %v389 = vunpack.c.l.b16 %v170
    %v390 = vunpack.c.l.b16 %v171
    %v391 = vunpack.c.l.b16 %v172
    %v392 = vunpack.c.l.b16 %v173
    %v393 = vunpack.c.l.b16 %v174
    %v394 = vunpack.c.l.b16 %v175
    %v395 = vunpack.c.l.b16 %v176
    %v396 = vunpack.c.l.b16 %v177
    %v397 = vunpack.c.l.b16 %v178
    %v398 = vunpack.c.l.b16 %v179
    %v399 = vunpack.c.l.b16 %v180
    %v400 = vunpack.c.l.b16 %v181
    %v401 = vunpack.c.l.b16 %v182
    %v402 = vunpack.c.l.b16 %v183
    %v403 = vunpack.c.l.b16 %v184
    %v404 = vunpack.c.l.b16 %v185
    %v405 = vunpack.c.l.b16 %v186
    %v406 = vunpack.c.l.b16 %v187
    %v407 = vunpack.c.l.b16 %v188
    %v408 = vunpack.c.l.b16 %v189
    %v409 = vunpack.c.l.b16 %v190
    %v410 = vunpack.c.l.b16 %v191
    %v411 = vunpack.c.l.b16 %v192
    %v412 = vunpack.c.l.b16 %v193
    %v413 = vunpack.c.l.b16 %v194
    %v414 = vunpack.c.l.b16 %v195
    %v415 = vunpack.c.l.b16 %v196
    %v416 = vunpack.c.l.b16 %v197
    %v417 = vunpack.c.l.b16 %v198
    %v418 = vunpack.c.l.b16 %v199
    %v419 = vunpack.c.l.b16 %v200
    %v420 = vunpack.c.l.b16 %v201
    %v421 = vunpack.c.l.b16 %v202
    %v422 = vunpack.c.l.b16 %v203
    %v423 = vunpack.c.l.b16 %v204
    %v424 = vunpack.c.l.b16 %v205
    %v425 = vunpack.c.l.b16 %v206
    %v426 = vunpack.c.l.b16 %v207
    %v427 = vunpack.c.l.b16 %v208
    %v428 = vunpack.c.l.b16 %v209
    %v429 = vunpack.c.l.b16 %v210
    %v430 = vunpack.c.l.b16 %v211
    %v431 = vunpack.c.l.b16 %v212
    %v432 = vunpack.c.l.b16 %v213
    %v433 = vunpack.c.l.b16 %v214
    %v434 = vunpack.c.l.b16 %v215
    %v435 = vpack.c.b16 %v340, %v339
    %v436 = vpack.c.b16 %v342, %v341
    %v437 = vpack.c.b16 %v344, %v343
    %v438 = vpack.c.b16 %v346, %v345
    %v439 = vpack.c.b16 %v348, %v347
    %v440 = vpack.c.b16 %v350, %v349
    %v441 = vpack.c.b16 %v352, %v351
    %v442 = vpack.c.b16 %v354, %v353
    %v443 = vpack.c.b16 %v356, %v355
    %v444 = vpack.c.b16 %v358, %v357
    %v445 = vpack.c.b16 %v360, %v359
    %v446 = vpack.c.b16 %v362, %v361
    %v447 = vpack.c.b16 %v364, %v363
    %v448 = vpack.c.b16 %v366, %v365
    %v449 = vpack.c.b16 %v368, %v367
    %v450 = vpack.c.b16 %v370, %v369
    %v451 = vpack.c.b16 %v372, %v371
    %v452 = vpack.c.b16 %v374, %v373
    %v453 = vpack.c.b16 %v376, %v375
    %v454 = vpack.c.b16 %v378, %v377
    %v455 = vpack.c.b16 %v380, %v379
    %v456 = vpack.c.b16 %v382, %v381
    %v457 = vpack.c.b16 %v384, %v383
    %v458 = vpack.c.b16 %v386, %v385
    %v459 = vpack.c.b16 %v388, %v387
    %v460 = vpack.c.b16 %v390, %v389
    %v461 = vpack.c.b16 %v392, %v391
    %v462 = vpack.c.b16 %v394, %v393
    %v463 = vpack.c.b16 %v396, %v395
    %v464 = vpack.c.b16 %v398, %v397
    %v465 = vpack.c.b16 %v400, %v399
    %v466 = vpack.c.b16 %v402, %v401
    %v467 = vpack.c.b16 %v404, %v403
    %v468 = vpack.c.b16 %v406, %v405
    %v469 = vpack.c.b16 %v408, %v407
    %v470 = vpack.c.b16 %v410, %v409
    %v471 = vpack.c.b16 %v412, %v411
    %v472 = vpack.c.b16 %v414, %v413
    %v473 = vpack.c.b16 %v416, %v415
    %v474 = vpack.c.b16 %v418, %v417
    %v475 = vpack.c.b16 %v420, %v419
    %v476 = vpack.c.b16 %v422, %v421
    %v477 = vpack.c.b16 %v424, %v423
    %v478 = vpack.c.b16 %v426, %v425
    %v479 = vpack.c.b16 %v428, %v427
    %v480 = vpack.c.b16 %v430, %v429
    %v481 = vpack.c.b16 %v432, %v431
    %v482 = vpack.c.b16 %v434, %v433
    %531 = vmatpush.bf16.msra.mxu0 %v442
    %532 = vmatpush.bf16.msra.mxu0 %v441
    %533 = vmatpush.bf16.msra.mxu0 %v440
    %534 = vmatpush.bf16.msra.mxu0 %v439
    %535 = vmatpush.bf16.msra.mxu0 %v438
    %536 = vmatpush.bf16.msra.mxu0 %v437
    %537 = vmatpush.bf16.msra.mxu0 %v436
    %538 = vmatpush.bf16.msra.mxu0 %v435
    %539 = vmatmul.bf16.gmra.mxu0 %v231
    %v540 = vpop.f32.mrf.mxu0
    %v541 = vadd.f32 0.0, %v540
    %v542 = vpop.f32.mrf.mxu0
    %543 = vdwg.mxu0
    %544 = vmatpush.bf16.msra.mxu0 %v450
    %545 = vmatpush.bf16.msra.mxu0 %v449
    %546 = vmatpush.bf16.msra.mxu0 %v448
    %547 = vmatpush.bf16.msra.mxu0 %v447
    %548 = vmatpush.bf16.msra.mxu0 %v446
    %549 = vmatpush.bf16.msra.mxu0 %v445
    %550 = vmatpush.bf16.msra.mxu0 %v444
    %551 = vmatpush.bf16.msra.mxu0 %v443
    %552 = vmatmul.bf16.gmra.mxu0 %v232
    %v553 = vpop.f32.mrf.mxu0
    %v554 = vadd.f32 %v541, %v553
    %v555 = vpop.f32.mrf.mxu0
    %556 = vdwg.mxu0
    %557 = vmatpush.bf16.msra.mxu0 %v458
    %558 = vmatpush.bf16.msra.mxu0 %v457
    %559 = vmatpush.bf16.msra.mxu0 %v456
    %560 = vmatpush.bf16.msra.mxu0 %v455
    %561 = vmatpush.bf16.msra.mxu0 %v454
    %562 = vmatpush.bf16.msra.mxu0 %v453
    %563 = vmatpush.bf16.msra.mxu0 %v452
    %564 = vmatpush.bf16.msra.mxu0 %v451
    %565 = vmatmul.bf16.gmra.mxu0 %v233
    %v566 = vpop.f32.mrf.mxu0
    %v567 = vadd.f32 %v554, %v566
    %v568 = vpop.f32.mrf.mxu0
    %569 = vdwg.mxu0
    %570 = vmatpush.bf16.msra.mxu0 %v466
    %571 = vmatpush.bf16.msra.mxu0 %v465
    %572 = vmatpush.bf16.msra.mxu0 %v464
    %573 = vmatpush.bf16.msra.mxu0 %v463
    %574 = vmatpush.bf16.msra.mxu0 %v462
    %575 = vmatpush.bf16.msra.mxu0 %v461
    %576 = vmatpush.bf16.msra.mxu0 %v460
    %577 = vmatpush.bf16.msra.mxu0 %v459
    %578 = vmatmul.bf16.gmra.mxu0 %v234
    %v579 = vpop.f32.mrf.mxu0
    %v580 = vadd.f32 %v567, %v579
    %v581 = vpop.f32.mrf.mxu0
    %582 = vdwg.mxu0
    %583 = vmatpush.bf16.msra.mxu0 %v474
    %584 = vmatpush.bf16.msra.mxu0 %v473
    %585 = vmatpush.bf16.msra.mxu0 %v472
    %586 = vmatpush.bf16.msra.mxu0 %v471
    %587 = vmatpush.bf16.msra.mxu0 %v470
    %588 = vmatpush.bf16.msra.mxu0 %v469
    %589 = vmatpush.bf16.msra.mxu0 %v468
    %590 = vmatpush.bf16.msra.mxu0 %v467
    %591 = vmatmul.bf16.gmra.mxu0 %v235
    %v592 = vpop.f32.mrf.mxu0
    %v593 = vadd.f32 %v580, %v592
    %v594 = vpop.f32.mrf.mxu0
    %595 = vdwg.mxu0
    %596 = vmatpush.bf16.msra.mxu0 %v482
    %597 = vmatpush.bf16.msra.mxu0 %v481
    %598 = vmatpush.bf16.msra.mxu0 %v480
    %599 = vmatpush.bf16.msra.mxu0 %v479
    %600 = vmatpush.bf16.msra.mxu0 %v478
    %601 = vmatpush.bf16.msra.mxu0 %v477
    %602 = vmatpush.bf16.msra.mxu0 %v476
    %603 = vmatpush.bf16.msra.mxu0 %v475
    %604 = vmatmul.bf16.gmra.mxu0 %v236
    %v605 = vpop.f32.mrf.mxu0
    %v606 = vadd.f32 %v593, %v605
    %v607 = vpop.f32.mrf.mxu0
    %608 = vdwg.mxu0
    %v612 = vunpack.c.l.b16 %v216
    %v613 = vunpack.c.h.b16 %v216
    %v614 = vunpack.c.l.b16 %v217
    %v615 = vunpack.c.h.b16 %v217
    %v616 = vunpack.c.l.b16 %v218
    %v617 = vunpack.c.h.b16 %v218
    %v618 = vpack.c.b16 %v612, %v612
    %v619 = vpack.c.b16 %v613, %v613
    %v620 = vpack.c.b16 %v614, %v614
    %v621 = vpack.c.b16 %v615, %v615
    %v622 = vpack.c.b16 %v616, %v616
    %v623 = vpack.c.b16 %v617, %v617
    %v726 = vunpack.c.l.b16 %v24
    %v727 = vunpack.c.l.b16 %v25
    %v728 = vunpack.c.l.b16 %v26
    %v729 = vunpack.c.l.b16 %v27
    %v730 = vunpack.c.l.b16 %v28
    %v731 = vunpack.c.l.b16 %v29
    %v732 = vunpack.c.l.b16 %v30
    %v733 = vunpack.c.l.b16 %v31
    %v734 = vunpack.c.l.b16 %v32
    %v735 = vunpack.c.l.b16 %v33
    %v736 = vunpack.c.l.b16 %v34
    %v737 = vunpack.c.l.b16 %v35
    %v738 = vunpack.c.l.b16 %v36
    %v739 = vunpack.c.l.b16 %v37
    %v740 = vunpack.c.l.b16 %v38
    %v741 = vunpack.c.l.b16 %v39
    %v742 = vunpack.c.l.b16 %v40
    %v743 = vunpack.c.l.b16 %v41
    %v744 = vunpack.c.l.b16 %v42
    %v745 = vunpack.c.l.b16 %v43
    %v746 = vunpack.c.l.b16 %v44
    %v747 = vunpack.c.l.b16 %v45
    %v748 = vunpack.c.l.b16 %v46
    %v749 = vunpack.c.l.b16 %v47
    %v750 = vunpack.c.l.b16 %v48
    %v751 = vunpack.c.l.b16 %v49
    %v752 = vunpack.c.l.b16 %v50
    %v753 = vunpack.c.l.b16 %v51
    %v754 = vunpack.c.l.b16 %v52
    %v755 = vunpack.c.l.b16 %v53
    %v756 = vunpack.c.l.b16 %v54
    %v757 = vunpack.c.l.b16 %v55
    %v758 = vunpack.c.l.b16 %v56
    %v759 = vunpack.c.l.b16 %v57
    %v760 = vunpack.c.l.b16 %v58
    %v761 = vunpack.c.l.b16 %v59
    %v762 = vunpack.c.l.b16 %v60
    %v763 = vunpack.c.l.b16 %v61
    %v764 = vunpack.c.l.b16 %v62
    %v765 = vunpack.c.l.b16 %v63
    %v766 = vunpack.c.l.b16 %v64
    %v767 = vunpack.c.l.b16 %v65
    %v768 = vunpack.c.l.b16 %v66
    %v769 = vunpack.c.l.b16 %v67
    %v770 = vunpack.c.l.b16 %v68
    %v771 = vunpack.c.l.b16 %v69
    %v772 = vunpack.c.l.b16 %v70
    %v773 = vunpack.c.l.b16 %v71
    %v774 = vunpack.c.l.b16 %v72
    %v775 = vunpack.c.l.b16 %v73
    %v776 = vunpack.c.l.b16 %v74
    %v777 = vunpack.c.l.b16 %v75
    %v778 = vunpack.c.l.b16 %v76
    %v779 = vunpack.c.l.b16 %v77
    %v780 = vunpack.c.l.b16 %v78
    %v781 = vunpack.c.l.b16 %v79
    %v782 = vunpack.c.l.b16 %v80
    %v783 = vunpack.c.l.b16 %v81
    %v784 = vunpack.c.l.b16 %v82
    %v785 = vunpack.c.l.b16 %v83
    %v786 = vunpack.c.l.b16 %v84
    %v787 = vunpack.c.l.b16 %v85
    %v788 = vunpack.c.l.b16 %v86
    %v789 = vunpack.c.l.b16 %v87
    %v790 = vunpack.c.l.b16 %v88
    %v791 = vunpack.c.l.b16 %v89
    %v792 = vunpack.c.l.b16 %v90
    %v793 = vunpack.c.l.b16 %v91
    %v794 = vunpack.c.l.b16 %v92
    %v795 = vunpack.c.l.b16 %v93
    %v796 = vunpack.c.l.b16 %v94
    %v797 = vunpack.c.l.b16 %v95
    %v798 = vunpack.c.l.b16 %v96
    %v799 = vunpack.c.l.b16 %v97
    %v800 = vunpack.c.l.b16 %v98
    %v801 = vunpack.c.l.b16 %v99
    %v802 = vunpack.c.l.b16 %v100
    %v803 = vunpack.c.l.b16 %v101
    %v804 = vunpack.c.l.b16 %v102
    %v805 = vunpack.c.l.b16 %v103
    %v806 = vunpack.c.l.b16 %v104
    %v807 = vunpack.c.l.b16 %v105
    %v808 = vunpack.c.l.b16 %v106
    %v809 = vunpack.c.l.b16 %v107
    %v810 = vunpack.c.l.b16 %v108
    %v811 = vunpack.c.l.b16 %v109
    %v812 = vunpack.c.l.b16 %v110
    %v813 = vunpack.c.l.b16 %v111
    %v814 = vunpack.c.l.b16 %v112
    %v815 = vunpack.c.l.b16 %v113
    %v816 = vunpack.c.l.b16 %v114
    %v817 = vunpack.c.l.b16 %v115
    %v818 = vunpack.c.l.b16 %v116
    %v819 = vunpack.c.l.b16 %v117
    %v820 = vunpack.c.l.b16 %v118
    %v821 = vunpack.c.l.b16 %v119
    %v822 = vpack.c.b16 %v727, %v726
    %v823 = vpack.c.b16 %v729, %v728
    %v824 = vpack.c.b16 %v731, %v730
    %v825 = vpack.c.b16 %v733, %v732
    %v826 = vpack.c.b16 %v735, %v734
    %v827 = vpack.c.b16 %v737, %v736
    %v828 = vpack.c.b16 %v739, %v738
    %v829 = vpack.c.b16 %v741, %v740
    %v830 = vpack.c.b16 %v743, %v742
    %v831 = vpack.c.b16 %v745, %v744
    %v832 = vpack.c.b16 %v747, %v746
    %v833 = vpack.c.b16 %v749, %v748
    %v834 = vpack.c.b16 %v751, %v750
    %v835 = vpack.c.b16 %v753, %v752
    %v836 = vpack.c.b16 %v755, %v754
    %v837 = vpack.c.b16 %v757, %v756
    %v838 = vpack.c.b16 %v759, %v758
    %v839 = vpack.c.b16 %v761, %v760
    %v840 = vpack.c.b16 %v763, %v762
    %v841 = vpack.c.b16 %v765, %v764
    %v842 = vpack.c.b16 %v767, %v766
    %v843 = vpack.c.b16 %v769, %v768
    %v844 = vpack.c.b16 %v771, %v770
    %v845 = vpack.c.b16 %v773, %v772
    %v846 = vpack.c.b16 %v775, %v774
    %v847 = vpack.c.b16 %v777, %v776
    %v848 = vpack.c.b16 %v779, %v778
    %v849 = vpack.c.b16 %v781, %v780
    %v850 = vpack.c.b16 %v783, %v782
    %v851 = vpack.c.b16 %v785, %v784
    %v852 = vpack.c.b16 %v787, %v786
    %v853 = vpack.c.b16 %v789, %v788
    %v854 = vpack.c.b16 %v791, %v790
    %v855 = vpack.c.b16 %v793, %v792
    %v856 = vpack.c.b16 %v795, %v794
    %v857 = vpack.c.b16 %v797, %v796
    %v858 = vpack.c.b16 %v799, %v798
    %v859 = vpack.c.b16 %v801, %v800
    %v860 = vpack.c.b16 %v803, %v802
    %v861 = vpack.c.b16 %v805, %v804
    %v862 = vpack.c.b16 %v807, %v806
    %v863 = vpack.c.b16 %v809, %v808
    %v864 = vpack.c.b16 %v811, %v810
    %v865 = vpack.c.b16 %v813, %v812
    %v866 = vpack.c.b16 %v815, %v814
    %v867 = vpack.c.b16 %v817, %v816
    %v868 = vpack.c.b16 %v819, %v818
    %v869 = vpack.c.b16 %v821, %v820
    %918 = vmatpush.bf16.msra.mxu0 %v829
    %919 = vmatpush.bf16.msra.mxu0 %v828
    %920 = vmatpush.bf16.msra.mxu0 %v827
    %921 = vmatpush.bf16.msra.mxu0 %v826
    %922 = vmatpush.bf16.msra.mxu0 %v825
    %923 = vmatpush.bf16.msra.mxu0 %v824
    %924 = vmatpush.bf16.msra.mxu0 %v823
    %925 = vmatpush.bf16.msra.mxu0 %v822
    %926 = vmatmul.bf16.gmra.mxu0 %v618
    %v927 = vpop.f32.mrf.mxu0
    %v928 = vadd.f32 %v606, %v927
    %v929 = vpop.f32.mrf.mxu0
    %930 = vdwg.mxu0
    %931 = vmatpush.bf16.msra.mxu0 %v837
    %932 = vmatpush.bf16.msra.mxu0 %v836
    %933 = vmatpush.bf16.msra.mxu0 %v835
    %934 = vmatpush.bf16.msra.mxu0 %v834
    %935 = vmatpush.bf16.msra.mxu0 %v833
    %936 = vmatpush.bf16.msra.mxu0 %v832
    %937 = vmatpush.bf16.msra.mxu0 %v831
    %938 = vmatpush.bf16.msra.mxu0 %v830
    %939 = vmatmul.bf16.gmra.mxu0 %v619
    %v940 = vpop.f32.mrf.mxu0
    %v941 = vadd.f32 %v928, %v940
    %v942 = vpop.f32.mrf.mxu0
    %943 = vdwg.mxu0
    %944 = vmatpush.bf16.msra.mxu0 %v845
    %945 = vmatpush.bf16.msra.mxu0 %v844
    %946 = vmatpush.bf16.msra.mxu0 %v843
    %947 = vmatpush.bf16.msra.mxu0 %v842
    %948 = vmatpush.bf16.msra.mxu0 %v841
    %949 = vmatpush.bf16.msra.mxu0 %v840
    %950 = vmatpush.bf16.msra.mxu0 %v839
    %951 = vmatpush.bf16.msra.mxu0 %v838
    %952 = vmatmul.bf16.gmra.mxu0 %v620
    %v953 = vpop.f32.mrf.mxu0
    %v954 = vadd.f32 %v941, %v953
    %v955 = vpop.f32.mrf.mxu0
    %956 = vdwg.mxu0
    %957 = vmatpush.bf16.msra.mxu0 %v853
    %958 = vmatpush.bf16.msra.mxu0 %v852
    %959 = vmatpush.bf16.msra.mxu0 %v851
    %960 = vmatpush.bf16.msra.mxu0 %v850
    %961 = vmatpush.bf16.msra.mxu0 %v849
    %962 = vmatpush.bf16.msra.mxu0 %v848
    %963 = vmatpush.bf16.msra.mxu0 %v847
    %964 = vmatpush.bf16.msra.mxu0 %v846
    %965 = vmatmul.bf16.gmra.mxu0 %v621
    %v966 = vpop.f32.mrf.mxu0
    %v967 = vadd.f32 %v954, %v966
    %v968 = vpop.f32.mrf.mxu0
    %969 = vdwg.mxu0
    %970 = vmatpush.bf16.msra.mxu0 %v861
    %971 = vmatpush.bf16.msra.mxu0 %v860
    %972 = vmatpush.bf16.msra.mxu0 %v859
    %973 = vmatpush.bf16.msra.mxu0 %v858
    %974 = vmatpush.bf16.msra.mxu0 %v857
    %975 = vmatpush.bf16.msra.mxu0 %v856
    %976 = vmatpush.bf16.msra.mxu0 %v855
    %977 = vmatpush.bf16.msra.mxu0 %v854
    %978 = vmatmul.bf16.gmra.mxu0 %v622
    %v979 = vpop.f32.mrf.mxu0
    %v980 = vadd.f32 %v967, %v979
    %v981 = vpop.f32.mrf.mxu0
    %982 = vdwg.mxu0
    %983 = vmatpush.bf16.msra.mxu0 %v869
    %984 = vmatpush.bf16.msra.mxu0 %v868
    %985 = vmatpush.bf16.msra.mxu0 %v867
    %986 = vmatpush.bf16.msra.mxu0 %v866
    %987 = vmatpush.bf16.msra.mxu0 %v865
    %988 = vmatpush.bf16.msra.mxu0 %v864
    %989 = vmatpush.bf16.msra.mxu0 %v863
    %990 = vmatpush.bf16.msra.mxu0 %v862
    %991 = vmatmul.bf16.gmra.mxu0 %v623
    %v992 = vpop.f32.mrf.mxu0
    %v993 = vadd.f32 %v980, %v992
    %v994 = vpop.f32.mrf.mxu0
    %995 = vdwg.mxu0
    %v996 = vld [vmem:[%s3] sm:$0x1]
    %v998 = vperm.slane %v996, 0
    %v1000 = vadd.f32 %v993, %v998
    %v1001 = vmax.f32 %v1000, 0.0
    %v1002 = vld [vmem:[%s4] sm:$0xff]
    %v1003 = vld [vmem:[%s4 + $0x8] sm:$0xff]
    %v1004 = vld [vmem:[%s4 + $0x10] sm:$0xff]
    %v1005 = vld [vmem:[%s4 + $0x18] sm:$0xff]
    %v1006 = vld [vmem:[%s5] sm:$0x1]
    %v1008 = vperm.slane %v1006, 0
    %vm1010 = vcmask 261120
    %v1012 = vsel %vm1010, %v1001, 0
    %1014 = vmatpush.msra.mxu0 0.0
    %1015 = vmatpush.msra.mxu0 0.0
    %1016 = vmatpush.msra.mxu0 0.0
    %1017 = vmatpush.msra.mxu0 0.0
    %1018 = vmatpush.msra.mxu0 0.0
    %1019 = vmatpush.msra.mxu0 0.0
    %1020 = vmatpush.msra.mxu0 0.0
    %1021 = vmatpush.msra.mxu0 0.0
    %1022 = vmatpush.msra.mxu0 0.0
    %1023 = vmatpush.msra.mxu0 0.0
    %1024 = vmatpush.msra.mxu0 0.0
    %1025 = vmatpush.msra.mxu0 0.0
    %1026 = vmatpush.msra.mxu0 %v1005
    %1027 = vmatpush.msra.mxu0 %v1004
    %1028 = vmatpush.msra.mxu0 %v1003
    %1029 = vmatpush.msra.mxu0 %v1002
    %1030 = vmatmul.f32.gmra.mxu0 %v1012
    %v1031 = vpop.f32.mrf.mxu0
    %v1032 = vadd.f32 %v1008, %v1031
    %1033 = vdwg.mxu0
    %1034 = vst [vmem:[#allocation2] sm:$0xff] %v1032
    // Predicated region
    $region26: #{tpu_custom_call.1} parent=1 // pred_check
      _
    $region27: #{tpu_custom_call.1} parent=1 // pred_check_branch
      %1036 = sbr.rel (0) target = $region29
    $region28: #{tpu_custom_call.1} parent=1 // pred_region
      %1038 = vsyncadd [#allocation3], 0
      %s1040 = sshll.u32 [#allocation2], 4
      %s1041 = int_to_ptr.vmem [resolvable:$true] %s1040
      %s1042 = sshll.u32 %s6, 4
      %s1043 = int_to_ptr.hbm [resolvable:$true] %s1042
      %1045 = dma.vmem_to_hbm [thread:$0]  %s1041, 128, %s1043, [#allocation3]
    $region29: #{tpu_custom_call.1} parent=1 // pred_fallthru
      _
    // Predicated region
    $region30: #{tpu_custom_call.1} parent=1 // pred_check
      _
    $region31: #{tpu_custom_call.1} parent=1 // pred_check_branch
      %1047 = sbr.rel (0) target = $region33
    $region32: #{tpu_custom_call.1} parent=1 // pred_region
      %1049 = dma.done [#allocation3], 128
    $region33: #{tpu_custom_call.1} parent=1 // pred_fallthru
      _
    %1050 = vsyncpa [#allocation3], 1

</llo_original>
